<compile_context>
chip_gen: v7x
topology: tpu7x:2x2x1
jax: 0.10.0
libtpu: 0.0.40
codegen_flags: <defaults>
</compile_context>

<pallas_src>
import functools

import jax
import jax.numpy as jnp
from jax.experimental import pallas as pl
from jax.experimental.pallas import tpu as pltpu

_LANE = 128


def _round_up(x, m):
    return ((x + m - 1) // m) * m


def _focal_kernel(alpha_ref, labels_ref, preds_ref, out_ref, *, gamma,
                  num_classes):
    t = pl.program_id(1)

    @pl.when(t == 0)
    def _init():
        out_ref[...] = jnp.zeros_like(out_ref)

    logits = preds_ref[0].astype(jnp.float32)     # (C, T)  classes on sublanes
    labels = labels_ref[0]                         # (1, T)  int32

    # numerically stable log-softmax over the (small) class axis
    m = jnp.max(logits, axis=0, keepdims=True)                      # (1, T)
    shifted = logits - m                                            # (C, T)
    lse = jnp.log(jnp.sum(jnp.exp(shifted), axis=0, keepdims=True))  # (1, T)

    # gather the label-class shifted logit and alpha via a tiny static C loop
    shifted_t = jnp.zeros_like(lse)
    alpha_t = jnp.zeros_like(lse)
    for c in range(num_classes):
        sel = labels == c
        shifted_t = jnp.where(sel, shifted[c:c + 1, :], shifted_t)
        alpha_t = jnp.where(sel, alpha_ref[c], alpha_t)   # scalar from SMEM

    logp_t = shifted_t - lse            # (1, T)
    p_t = jnp.exp(logp_t)               # single extra exp per pixel
    one_minus = 1.0 - p_t

    g = float(gamma)
    if g == int(g) and 0 <= int(g) <= 4:
        # integer gamma (e.g. 2) -> pure VPU multiplies, no pow on the EUP
        w = jnp.ones_like(one_minus)
        for _ in range(int(g)):
            w = w * one_minus
    else:
        w = jnp.power(one_minus, jnp.float32(g))

    # padded pixels carry label == -1 -> alpha_t == 0 -> zero contribution
    loss = (-alpha_t) * w * logp_t      # (1, T)

    # fold the per-pixel loss to a lane-dense (1, 128) partial sum (pure VPU,
    # short dependency chains), accumulate into the resident output block
    tile = loss.shape[1]
    n_chunks = tile // _LANE
    n_acc = min(4, n_chunks)
    accs = [loss[:, k * _LANE:(k + 1) * _LANE] for k in range(n_acc)]
    for k in range(n_acc, n_chunks):
        accs[k % n_acc] = accs[k % n_acc] + loss[:, k * _LANE:(k + 1) * _LANE]
    partial = accs[0]
    for a in accs[1:]:
        partial = partial + a

    out_ref[...] += partial.reshape(1, 1, _LANE)


def focal_loss(preds_nchw, labels_bhw, alpha_vec, *, gamma=2.0,
               size_average=True, tile_hw=8192):
    B, C, H, W = preds_nchw.shape
    assert labels_bhw.shape == (B, H, W)
    assert alpha_vec.shape == (C,)
    HW = H * W

    # lane-aligned tile along the pixel axis; pad HW up to a tile multiple
    tile_hw = min(_round_up(int(tile_hw), _LANE), _round_up(HW, _LANE))
    hw_pad = _round_up(HW, tile_hw)
    num_tiles = hw_pad // tile_hw

    # natural NCHW flatten — no transpose, no extra HBM round trip
    preds = preds_nchw.reshape(B, C, HW)
    labels = labels_bhw.reshape(B, 1, HW).astype(jnp.int32)
    if hw_pad != HW:
        pad = hw_pad - HW
        preds = jnp.pad(preds, ((0, 0), (0, 0), (0, pad)))
        labels = jnp.pad(labels, ((0, 0), (0, 0), (0, pad)),
                         constant_values=-1)   # -1 => excluded from the loss

    alpha = alpha_vec.astype(jnp.float32)

    kernel = functools.partial(_focal_kernel, gamma=float(gamma),
                               num_classes=C)

    partials = pl.pallas_call(
        kernel,
        out_shape=jax.ShapeDtypeStruct((B, 1, _LANE), jnp.float32),
        grid_spec=pltpu.PrefetchScalarGridSpec(
            num_scalar_prefetch=1,                 # alpha -> SMEM
            grid=(B, num_tiles),
            in_specs=[
                pl.BlockSpec((1, 1, tile_hw), lambda b, t, a: (b, 0, t)),  # labels
                pl.BlockSpec((1, C, tile_hw), lambda b, t, a: (b, 0, t)),  # preds
            ],
            out_specs=pl.BlockSpec((1, 1, _LANE), lambda b, t, a: (b, 0, 0)),
        ),
        compiler_params=pltpu.CompilerParams(
            dimension_semantics=("parallel", "arbitrary")),
    )(alpha, labels, preds)

    total = jnp.sum(partials)
    if size_average:
        total = total / jnp.float32(B * HW)
    return total


def focal_loss_ref(preds_nchw, labels_bhw, alpha_vec, *, gamma=2.0,
                   size_average=True):
    B, C, H, W = preds_nchw.shape
    x = jnp.transpose(preds_nchw, (0, 2, 3, 1)).reshape(-1, C)
    lab = labels_bhw.reshape(-1).astype(jnp.int32)
    logsoft = jax.nn.log_softmax(x, axis=1)
    soft = jnp.exp(logsoft)
    p_t = jnp.take_along_axis(soft, lab[:, None], axis=1)[:, 0]
    logp_t = jnp.take_along_axis(logsoft, lab[:, None], axis=1)[:, 0]
    a_t = alpha_vec[lab]
    loss = -a_t * jnp.power(1.0 - p_t, gamma) * logp_t
    return jnp.mean(loss) if size_average else jnp.sum(loss)


if __name__ == "__main__":
    # deterministic parameter init (module __init__ with alpha=0.25, 3 classes)
    num_classes = 3
    alpha_scalar = 0.25
    gamma = 2.0
    alpha_vec = jnp.concatenate(
        [jnp.array([alpha_scalar], jnp.float32),
         jnp.full((num_classes - 1,), 1.0 - alpha_scalar, jnp.float32)])

    key = jax.random.PRNGKey(0)

    # case 1: lane-aligned spatial size, mean reduction
    B, H, W = 2, 16, 16
    key, kp, kl = jax.random.split(key, 3)
    preds = jax.random.normal(kp, (B, num_classes, H, W), dtype=jnp.float32)
    labels = jax.random.randint(kl, (B, H, W), 0, num_classes, dtype=jnp.int32)
    out = jax.block_until_ready(
        focal_loss(preds, labels, alpha_vec, gamma=gamma, size_average=True))
    ref = focal_loss_ref(preds, labels, alpha_vec, gamma=gamma,
                         size_average=True)
    assert jnp.allclose(out, ref, atol=1e-5, rtol=1e-5), (out, ref)

    # case 2: ragged spatial size (exercises padded tail) + sum reduction
    B2, H2, W2 = 2, 10, 13
    key, kp2, kl2 = jax.random.split(key, 3)
    preds2 = jax.random.normal(kp2, (B2, num_classes, H2, W2),
                               dtype=jnp.float32)
    labels2 = jax.random.randint(kl2, (B2, H2, W2), 0, num_classes,
                                 dtype=jnp.int32)
    out2 = jax.block_until_ready(
        focal_loss(preds2, labels2, alpha_vec, gamma=gamma,
                   size_average=False))
    ref2 = focal_loss_ref(preds2, labels2, alpha_vec, gamma=gamma,
                          size_average=False)
    assert jnp.allclose(out2, ref2, atol=1e-4, rtol=1e-5), (out2, ref2)

    print("KERNEL_OK")
</pallas_src>

<mosaic_0001>
module attributes {stable_mosaic.version = 11 : i64} {
  func.func @_focal_kernel(%arg0: i32, %arg1: i32, %arg2: memref<3xf32, #tpu.memory_space<smem>>, %arg3: memref<1x1x256xi32, #tpu.memory_space<vmem>>, %arg4: memref<1x3x256xf32, #tpu.memory_space<vmem>>, %arg5: memref<1x1x128xf32, #tpu.memory_space<vmem>>) attributes {dimension_semantics = [#tpu.dimension_semantics<parallel>, #tpu.dimension_semantics<arbitrary>], iteration_bounds = array<i64: 2, 1>, scalar_prefetch = 1 : i64, scratch_operands = 0 : i64, tpu.core_type = #tpu.core_type<tc>, window_params = [{transform_indices = @transform_0, window_bounds = array<i64: 1, 1, 256>}, {transform_indices = @transform_1, window_bounds = array<i64: 1, 3, 256>}, {transform_indices = @transform_2, window_bounds = array<i64: 1, 1, 128>}]} {
    %c0_i32 = arith.constant 0 : i32
    %0 = arith.cmpi eq, %arg1, %c0_i32 : i32
    %1 = arith.extui %0 : i1 to i32
    %c0_i32_0 = arith.constant 0 : i32
    %2 = arith.cmpi ne, %1, %c0_i32_0 : i32
    scf.if %2 {
      %cst_20 = arith.constant 0.000000e+00 : f32
      %56 = vector.broadcast %cst_20 : f32 to vector<1x1x128xf32>
      %c0_21 = arith.constant 0 : index
      %c0_22 = arith.constant 0 : index
      %c0_23 = arith.constant 0 : index
      %57 = vector.load %arg5[%c0_21, %c0_22, %c0_23] : memref<1x1x128xf32, #tpu.memory_space<vmem>>, vector<1x1x128xf32>
      tpu.vector_store %arg5[%c0_21, %c0_22, %c0_23], %56 {strides = array<i32>} : memref<1x1x128xf32, #tpu.memory_space<vmem>>, vector<1x1x128xf32>,
    } else {
    }
    %c0 = arith.constant 0 : index
    %c0_1 = arith.constant 0 : index
    %c0_2 = arith.constant 0 : index
    %3 = vector.load %arg4[%c0, %c0_1, %c0_2] : memref<1x3x256xf32, #tpu.memory_space<vmem>>, vector<1x3x256xf32>
    %4 = vector.shape_cast %3 : vector<1x3x256xf32> to vector<3x256xf32>
    %c0_3 = arith.constant 0 : index
    %c0_4 = arith.constant 0 : index
    %c0_5 = arith.constant 0 : index
    %5 = vector.load %arg3[%c0_3, %c0_4, %c0_5] : memref<1x1x256xi32, #tpu.memory_space<vmem>>, vector<1x1x256xi32>
    %6 = vector.shape_cast %5 : vector<1x1x256xi32> to vector<1x256xi32>
    %cst = arith.constant dense<0xFF800000> : vector<256xf32>
    %7 = vector.multi_reduction <maximumf>, %4, %cst [0] : vector<3x256xf32> to vector<256xf32>
    %8 = vector.shape_cast %7 : vector<256xf32> to vector<1x256xf32>
    %9 = vector.broadcast %8 : vector<1x256xf32> to vector<3x256xf32>
    %10 = arith.subf %4, %9 : vector<3x256xf32>
    %11 = math.exp %10 : vector<3x256xf32>
    %cst_6 = arith.constant dense<0.000000e+00> : vector<256xf32>
    %12 = vector.multi_reduction <add>, %11, %cst_6 [0] : vector<3x256xf32> to vector<256xf32>
    %13 = vector.shape_cast %12 : vector<256xf32> to vector<1x256xf32>
    %14 = math.log %13 : vector<1x256xf32>
    %cst_7 = arith.constant 0.000000e+00 : f32
    %15 = vector.broadcast %cst_7 : f32 to vector<1x256xf32>
    %cst_8 = arith.constant 0.000000e+00 : f32
    %16 = vector.broadcast %cst_8 : f32 to vector<1x256xf32>
    %c0_i32_9 = arith.constant 0 : i32
    %17 = vector.broadcast %c0_i32_9 : i32 to vector<1x256xi32>
    %18 = arith.cmpi eq, %6, %17 : vector<1x256xi32>
    %19 = vector.extract_strided_slice %10 {offsets = [0, 0], sizes = [1, 256], strides = [1, 1]} : vector<3x256xf32> to vector<1x256xf32>
    %20 = arith.select %18, %19, %15 : vector<1x256xi1>, vector<1x256xf32>
    %c0_10 = arith.constant 0 : index
    %21 = memref.load %arg2[%c0_10] : memref<3xf32, #tpu.memory_space<smem>>
    %22 = vector.broadcast %21 : f32 to vector<1x256xf32>
    %23 = arith.select %18, %22, %16 : vector<1x256xi1>, vector<1x256xf32>
    %c1_i32 = arith.constant 1 : i32
    %24 = vector.broadcast %c1_i32 : i32 to vector<1x256xi32>
    %25 = arith.cmpi eq, %6, %24 : vector<1x256xi32>
    %26 = vector.extract_strided_slice %10 {offsets = [1, 0], sizes = [1, 256], strides = [1, 1]} : vector<3x256xf32> to vector<1x256xf32>
    %27 = arith.select %25, %26, %20 : vector<1x256xi1>, vector<1x256xf32>
    %c1 = arith.constant 1 : index
    %28 = memref.load %arg2[%c1] : memref<3xf32, #tpu.memory_space<smem>>
    %29 = vector.broadcast %28 : f32 to vector<1x256xf32>
    %30 = arith.select %25, %29, %23 : vector<1x256xi1>, vector<1x256xf32>
    %c2_i32 = arith.constant 2 : i32
    %31 = vector.broadcast %c2_i32 : i32 to vector<1x256xi32>
    %32 = arith.cmpi eq, %6, %31 : vector<1x256xi32>
    %33 = vector.extract_strided_slice %10 {offsets = [2, 0], sizes = [1, 256], strides = [1, 1]} : vector<3x256xf32> to vector<1x256xf32>
    %34 = arith.select %32, %33, %27 : vector<1x256xi1>, vector<1x256xf32>
    %c2 = arith.constant 2 : index
    %35 = memref.load %arg2[%c2] : memref<3xf32, #tpu.memory_space<smem>>
    %36 = vector.broadcast %35 : f32 to vector<1x256xf32>
    %37 = arith.select %32, %36, %30 : vector<1x256xi1>, vector<1x256xf32>
    %38 = arith.subf %34, %14 : vector<1x256xf32>
    %39 = math.exp %38 : vector<1x256xf32>
    %cst_11 = arith.constant 1.000000e+00 : f32
    %40 = vector.broadcast %cst_11 : f32 to vector<1x256xf32>
    %41 = arith.subf %40, %39 : vector<1x256xf32>
    %cst_12 = arith.constant 1.000000e+00 : f32
    %42 = vector.broadcast %cst_12 : f32 to vector<1x256xf32>
    %43 = arith.mulf %42, %41 : vector<1x256xf32>
    %44 = arith.mulf %43, %41 : vector<1x256xf32>
    %cst_13 = arith.constant 0.000000e+00 : f32
    %45 = vector.broadcast %cst_13 : f32 to vector<1x256xf32>
    %46 = arith.subf %45, %37 : vector<1x256xf32>
    %47 = arith.mulf %46, %44 : vector<1x256xf32>
    %48 = arith.mulf %47, %38 : vector<1x256xf32>
    %49 = vector.extract_strided_slice %48 {offsets = [0, 0], sizes = [1, 128], strides = [1, 1]} : vector<1x256xf32> to vector<1x128xf32>
    %50 = vector.extract_strided_slice %48 {offsets = [0, 128], sizes = [1, 128], strides = [1, 1]} : vector<1x256xf32> to vector<1x128xf32>
    %51 = arith.addf %49, %50 : vector<1x128xf32>
    %c0_14 = arith.constant 0 : index
    %c0_15 = arith.constant 0 : index
    %c0_16 = arith.constant 0 : index
    %52 = vector.load %arg5[%c0_14, %c0_15, %c0_16] : memref<1x1x128xf32, #tpu.memory_space<vmem>>, vector<1x1x128xf32>
    %53 = vector.shape_cast %51 : vector<1x128xf32> to vector<1x1x128xf32>
    %54 = arith.addf %52, %53 : vector<1x1x128xf32>
    %c0_17 = arith.constant 0 : index
    %c0_18 = arith.constant 0 : index
    %c0_19 = arith.constant 0 : index
    %55 = vector.load %arg5[%c0_17, %c0_18, %c0_19] : memref<1x1x128xf32, #tpu.memory_space<vmem>>, vector<1x1x128xf32>
    tpu.vector_store %arg5[%c0_17, %c0_18, %c0_19], %54 {strides = array<i32>} : memref<1x1x128xf32, #tpu.memory_space<vmem>>, vector<1x1x128xf32>,
    return
  }
  func.func @transform_0(%arg0: i32, %arg1: i32, %arg2: memref<3xf32, #tpu.memory_space<smem>>) -> (i32, i32, i32) {
    %c0_i32 = arith.constant 0 : i32
    %c0_i32_0 = arith.constant 0 : i32
    return %arg0, %c0_i32, %arg1 : i32, i32, i32
  }
  func.func @transform_1(%arg0: i32, %arg1: i32, %arg2: memref<3xf32, #tpu.memory_space<smem>>) -> (i32, i32, i32) {
    %c0_i32 = arith.constant 0 : i32
    %c0_i32_0 = arith.constant 0 : i32
    return %arg0, %c0_i32, %arg1 : i32, i32, i32
  }
  func.func @transform_2(%arg0: i32, %arg1: i32, %arg2: memref<3xf32, #tpu.memory_space<smem>>) -> (i32, i32, i32) {
    %c0_i32 = arith.constant 0 : i32
    %c0_i32_0 = arith.constant 0 : i32
    %c0_i32_1 = arith.constant 0 : i32
    return %arg0, %c0_i32, %c0_i32_0 : i32, i32, i32
  }
}

</mosaic_0001>

<llo_original>
// kernel: tpu_custom_call.1
$region0: #{tpu_custom_call.1}
  #allocation0 [shape = 'u32[]', space=smem, size = 0x4, offset = 0x4, fixed_abs, tag = 'smem constant byte address 0x4 - core index']
  #allocation1 [shape = 'u32[144,128]{1,0:T(1,128)}', space=vmem, size = 0x12000, scoped, tag = 'internal scratch']
  #allocation2 [shape = 's32[1]{0}', space=sflag, size = 0x4, scoped, tag = 'scoped memory for tpu_custom_call.1']
  #allocation3 [shape = 'u8[512]{0}', space=smem, size = 0x200, scoped, tag = 'prefetched SMEM operand 0']
  %s0 = inlined_call_operand.vmem [shape: f32[3], index: 0, kind: input, shape index: {}]
  %s1 = inlined_call_operand.vmem [shape: s32[2,1,256], index: 1, kind: input, shape index: {}]
  %s2 = inlined_call_operand.vmem [shape: f32[2,3,256], index: 2, kind: input, shape index: {}]
  %s3 = inlined_call_operand.hbm [shape: f32[2,1,128], index: 3, kind: output, shape index: {}]
  %s4 = sld [smem:[#allocation0]]
  $region45: #{tpu_custom_call.1} parent=0
    _
  %s6 = ssub.s32 1, %s4
  %s7 = scalar_select 0, %s6, %s4
  %s8 = sshll.u32 %s0, 4
  %s9 = int_to_ptr.vmem [resolvable:$true] %s8
  %11 = dma.vmem_to_smem %s9, 16, [#allocation3], [#allocation2]
  %12 = dma.done [#allocation2], 16
  %13 = sfence
  $region1: #{tpu_custom_call.1} parent=0
    #allocation4 [shape = 'u8[1024]{0}', space=vmem, size = 0x400, scoped, tag = 'output window, operand 0']
    #allocation5 [shape = 's32[2]{0}', space=sflag, size = 0x8, scoped, tag = 'scoped memory for tpu_custom_call.1']
    %14 = vsyncpa [#allocation5], 0
    %s15 = scalar_lea.sflag [#allocation5], 1
    %16 = vsyncpa %s15, 0
    loop: start=0, step=1, limit=4
    $region2: #{tpu_custom_call.1} parent=1 // loop_pre_header
      _
    $region3: #{tpu_custom_call.1} parent=1 // loop_header
      %s18 = sphi 0, %s22
      %p19 = scmp.ge.s32.totalorder %s18, 4
      %s25 = sphi 0, %s37
      %s26 = sphi 0, %s33
      %s27 = sphi 0, %s25
      %s28 = sphi 0, %s26
      %s29 = sphi 0, %s27
      %s30 = sphi 0, %s28
      %s42 = sphi 0, %s44
      %s45 = sphi 0, %s42
      %s46 = sphi 0, %s45
      %s62 = sphi 0, %s46
      %s70 = sphi 0, %s72
      %s73 = sphi 0, %s70
      %s74 = sphi 0, %s73
      %s90 = sphi 0, %s74
      %s96 = sphi 0, %s98
      %s99 = sphi 0, %s96
      %s100 = sphi 0, %s99
      %s116 = sphi 0, %s100
    $region4: #{tpu_custom_call.1} parent=1 // loop_header_branch
      %21 = sbr.rel (%p19) target = $region8
    $region5: #{tpu_custom_call.1} parent=1 // loop_body
      %s23 = ssub.s32 %s18, 1
      %s24 = ssub.s32 %s18, 2
      %s31 = sadd.s32 1, %s26
      %p32 = scmp.ge.s32.totalorder %s31, 1
      %s33 = scalar_select %p32, 0, %s31
      %s34 = sadd.s32 1, %s25
      %s35 = scalar_select %p32, %s34, %s25
      %p36 = scmp.ge.s32.totalorder %s35, 2
      %s37 = scalar_select %p36, 0, %s35
      %s38 = ssub.s32 %s25, %s37
      %s39 = ssub.s32 %s26, %s33
      %s40 = sor.u32 %s38, %s39
      %p41 = scmp.eq.s32.totalorder %s40, 0
      %s43 = sadd.s32 %s42, 1
      %s44 = scalar_select %p41, %s42, %s43
      %p47 = pneg %p41
      %p48 = scmp.eq.s32.totalorder %s18, 1
      %p49 = por %p47, %p48
      %p50 = scmp.ne.s32.totalorder %s42, %s45
      %p51 = scmp.eq.s32.totalorder %s18, 0
      %p52 = por %p50, %p51
      %p53 = scmp.ne.s32.totalorder %s42, %s45
      %p54 = scmp.eq.s32.totalorder %s23, 1
      %p55 = por %p53, %p54
      %p56 = scmp.ne.s32.totalorder %s45, %s46
      %p57 = scmp.eq.s32.totalorder %s23, 0
      %p58 = por %p56, %p57
      %p59 = scmp.ne.s32.totalorder %s45, %s46
      %p60 = scmp.eq.s32.totalorder %s24, 1
      %p61 = por %p59, %p60
      %p63 = scmp.ne.s32.totalorder %s46, %s62
      %p64 = scmp.eq.s32.totalorder %s24, 0
      %p65 = por %p63, %p64
      %s66 = ssub.s32 %s25, %s37
      %s67 = ssub.s32 %s26, %s33
      %s68 = sor.u32 %s66, %s67
      %p69 = scmp.eq.s32.totalorder %s68, 0
      %s71 = sadd.s32 %s70, 1
      %s72 = scalar_select %p69, %s70, %s71
      %p75 = pneg %p69
      %p76 = scmp.eq.s32.totalorder %s18, 1
      %p77 = por %p75, %p76
      %p78 = scmp.ne.s32.totalorder %s70, %s73
      %p79 = scmp.eq.s32.totalorder %s18, 0
      %p80 = por %p78, %p79
      %p81 = scmp.ne.s32.totalorder %s70, %s73
      %p82 = scmp.eq.s32.totalorder %s23, 1
      %p83 = por %p81, %p82
      %p84 = scmp.ne.s32.totalorder %s73, %s74
      %p85 = scmp.eq.s32.totalorder %s23, 0
      %p86 = por %p84, %p85
      %p87 = scmp.ne.s32.totalorder %s73, %s74
      %p88 = scmp.eq.s32.totalorder %s24, 1
      %p89 = por %p87, %p88
      %p91 = scmp.ne.s32.totalorder %s74, %s90
      %p92 = scmp.eq.s32.totalorder %s24, 0
      %p93 = por %p91, %p92
      %s94 = ssub.s32 %s25, %s37
      %p95 = scmp.eq.s32.totalorder %s94, 0
      %s97 = sadd.s32 %s96, 1
      %s98 = scalar_select %p95, %s96, %s97
      %p101 = pneg %p95
      %p102 = scmp.eq.s32.totalorder %s18, 1
      %p103 = por %p101, %p102
      %p104 = scmp.ne.s32.totalorder %s96, %s99
      %p105 = scmp.eq.s32.totalorder %s18, 0
      %p106 = por %p104, %p105
      %p107 = scmp.ne.s32.totalorder %s96, %s99
      %p108 = scmp.eq.s32.totalorder %s23, 1
      %p109 = por %p107, %p108
      %p110 = scmp.ne.s32.totalorder %s99, %s100
      %p111 = scmp.eq.s32.totalorder %s23, 0
      %p112 = por %p110, %p111
      %p113 = scmp.ne.s32.totalorder %s99, %s100
      %p114 = scmp.eq.s32.totalorder %s24, 1
      %p115 = por %p113, %p114
      %p117 = scmp.ne.s32.totalorder %s100, %s116
      %p118 = scmp.eq.s32.totalorder %s24, 0
      %p119 = por %p117, %p118
      %p120 = scmp.le.s32.totalorder 1, %s18
      %p121 = scmp.lt.s32.totalorder %s18, 3
      %p122 = pnand %p120, %p121
      %p123 = pneg %p122
      // Predicated region
      $region9: #{tpu_custom_call.1} parent=5 // pred_check
        _
      $region10: #{tpu_custom_call.1} parent=5 // pred_check_branch
        %125 = sbr.rel (%p122) target = $region12
      $region11: #{tpu_custom_call.1} parent=5 // pred_region
        %s126 = ssub.s32 %s18, 1
      $region12: #{tpu_custom_call.1} parent=5 // pred_fallthru
        _
      %p127 = scmp.lt.s32.totalorder %s18, 2
      // Predicated region
      $region13: #{tpu_custom_call.1} parent=5 // pred_check
        %p128 = pneg %p127
      $region14: #{tpu_custom_call.1} parent=5 // pred_check_branch
        %130 = sbr.rel (%p128) target = $region16
      $region15: #{tpu_custom_call.1} parent=5 // pred_region
        // Predicated region
        $region17: #{tpu_custom_call.1} parent=15 // pred_check
          %p131 = pneg %p52
        $region18: #{tpu_custom_call.1} parent=15 // pred_check_branch
          %133 = sbr.rel (%p131) target = $region20
        $region19: #{tpu_custom_call.1} parent=15 // pred_region
          %s134 = smul.u32 2, %s26
          %p135 = scmp.lt.s32.totalorder %s25, 1
          %s136 = scalar_select %p135, %s25, 1
          %p137 = scmp.lt.s32.totalorder %s134, 1
          %s138 = scalar_select %p137, %s134, 1
          %s139 = smul.addr %s136, 2
          %s140 = sadd.s32 %s138, %s139
          %s141 = scalar_lea.vmem %s1, %s140
          %s142 = smul.u32 2, %s26
        $region20: #{tpu_custom_call.1} parent=15 // pred_fallthru
          _
        // Predicated region
        $region21: #{tpu_custom_call.1} parent=15 // pred_check
          %p143 = pneg %p80
        $region22: #{tpu_custom_call.1} parent=15 // pred_check_branch
          %145 = sbr.rel (%p143) target = $region24
        $region23: #{tpu_custom_call.1} parent=15 // pred_region
          %s146 = smul.u32 2, %s26
          %p147 = scmp.lt.s32.totalorder %s25, 1
          %s148 = scalar_select %p147, %s25, 1
          %p149 = scmp.lt.s32.totalorder %s146, 1
          %s150 = scalar_select %p149, %s146, 1
          %s151 = smul.addr %s148, 2
          %s152 = sadd.s32 %s150, %s151
          %s153 = smul.addr %s152, 4
          %s154 = scalar_lea.vmem %s2, %s153
          %s155 = smul.u32 2, %s26
        $region24: #{tpu_custom_call.1} parent=15 // pred_fallthru
          _
      $region16: #{tpu_custom_call.1} parent=5 // pred_fallthru
        _
      %p156 = scmp.le.s32.totalorder 1, %s18
      %p157 = scmp.lt.s32.totalorder %s18, 3
      %p158 = pnand %p156, %p157
      %p159 = pneg %p158
      // Predicated region
      $region25: #{tpu_custom_call.1} parent=5 // pred_check
        _
      $region26: #{tpu_custom_call.1} parent=5 // pred_check_branch
        %161 = sbr.rel (%p158) target = $region28
      $region27: #{tpu_custom_call.1} parent=5 // pred_region
        %s162 = ssub.s32 %s18, 1
        %s163 = smul.u32 2, %s28
        %p164 = scmp.lt.s32.totalorder %s27, 1
        %s165 = scalar_select %p164, %s27, 1
        %p166 = scmp.lt.s32.totalorder %s163, 1
        %s167 = scalar_select %p166, %s163, 1
        %s168 = smul.addr %s165, 2
        %s169 = sadd.s32 %s167, %s168
        %s170 = scalar_lea.vmem %s1, %s169
        %p171 = pneg %p58
        %p172 = pneg %p55
        %s173 = smul.u32 2, %s28
        %p174 = scmp.lt.s32.totalorder %s27, 1
        %s175 = scalar_select %p174, %s27, 1
        %p176 = scmp.lt.s32.totalorder %s173, 1
        %s177 = scalar_select %p176, %s173, 1
        %s178 = smul.addr %s175, 2
        %s179 = sadd.s32 %s177, %s178
        %s180 = smul.addr %s179, 4
        %s181 = scalar_lea.vmem %s2, %s180
        %p182 = pneg %p86
        %p183 = pneg %p83
        %p184 = pneg %p112
        %p185 = pneg %p109
        %s186 = sand.u32 %s99, 1
        %s187 = scalar_lea.sflag [#allocation5], %s186
        %s188 = sand.u32 %s99, 1
        %s189 = scalar_lea.vmem [#allocation4], %s188
        %s190 = smul.u32 2, %s28
        %p191 = scmp.lt.s32.totalorder %s27, 1
        %s192 = scalar_select %p191, %s27, 1
        %p193 = scmp.lt.s32.totalorder %s190, 1
        %s194 = scalar_select %p193, %s190, 1
        %s195 = smul.addr %s192, 2
        %s196 = sadd.s32 %s194, %s195
        %s197 = scalar_lea.vmem %s1, %s196
        %s198 = smul.u32 2, %s28
        %s199 = smul.u32 2, %s28
        %p200 = scmp.lt.s32.totalorder %s27, 1
        %s201 = scalar_select %p200, %s27, 1
        %p202 = scmp.lt.s32.totalorder %s199, 1
        %s203 = scalar_select %p202, %s199, 1
        %s204 = smul.addr %s201, 2
        %s205 = sadd.s32 %s203, %s204
        %s206 = smul.addr %s205, 4
        %s207 = scalar_lea.vmem %s2, %s206
        %s208 = smul.u32 2, %s28
        %p209 = scmp.eq.s32.totalorder %s28, 0
        // Predicated region
        $region29: #{tpu_custom_call.1} parent=27 // pred_check
          %p210 = pneg %p209
        $region30: #{tpu_custom_call.1} parent=27 // pred_check_branch
          %212 = sbr.rel (%p210) target = $region32
        $region31: #{tpu_custom_call.1} parent=27 // pred_region
          %213 = vst [vmem:[%s189] sm:$0x1] 0.0
        $region32: #{tpu_custom_call.1} parent=27 // pred_fallthru
          _
        %v214 = vld [vmem:[%s207] sm:$0x77]
        %v215 = vld [vmem:[%s197] sm:$0x3]
        %v217 = vcombine.high %v214, %v214
        %vm219 = vcmask 1042432
        %v220 = vsel %vm219, %v214, -inf
        %v221 = vrot.slane %v220, 4
        %v222 = vmax.f32 %v220, %v221
        %v223 = vrot.slane %v222, 2
        %v224 = vmax.f32 %v222, %v223
        %v225 = vrot.slane %v224, 1
        %v226 = vmax.f32 %v224, %v225
        %v227 = vsel %vm219, %v217, -inf
        %v228 = vrot.slane %v227, 4
        %v229 = vmax.f32 %v227, %v228
        %v230 = vrot.slane %v229, 2
        %v231 = vmax.f32 %v229, %v230
        %v232 = vrot.slane %v231, 1
        %v233 = vmax.f32 %v231, %v232
        %v236 = vcombine.low %v226, %v233
        %v238 = vsub.f32 %v214, %v236
        %v239 = vmul.f32 %v238, 1.442695
        %v240 = vpow.pop %v239
        %v242 = vcombine.high %v240, %v240
        %v244 = vsel %vm219, %v240, 0.0
        %v245 = vrot.slane %v244, 4
        %v246 = vadd.f32 %v244, %v245
        %v247 = vrot.slane %v246, 2
        %v248 = vadd.f32 %v246, %v247
        %v249 = vrot.slane %v248, 1
        %v250 = vadd.f32 %v248, %v249
        %v251 = vsel %vm219, %v242, 0.0
        %v252 = vrot.slane %v251, 4
        %v253 = vadd.f32 %v251, %v252
        %v254 = vrot.slane %v253, 2
        %v255 = vadd.f32 %v253, %v254
        %v256 = vrot.slane %v255, 1
        %v257 = vadd.f32 %v255, %v256
        %v258 = vlog2.pop %v250
        %v259 = vmul.f32 %v258, 0.6931472
        %v260 = vlog2.pop %v257
        %v261 = vmul.f32 %v260, 0.6931472
        %vm262 = vcmp.eq.s32.totalorder %v215, 0
        %v265 = vunpack.c.l.s4 1966171168
        %v266 = vunpack.c.0.s8 %v265
        %v267 = vlaneseq
        %v268 = vshrl.u32 %v267, 7
        %v269 = vsub.s32 %v266, %v268
        %v270 = vrot.slane %v238, %v269
        %v272 = vunpack.c.l.s4 1966171168
        %v273 = vunpack.c.0.s8 %v272
        %v274 = vlaneseq
        %v275 = vshrl.u32 %v274, 7
        %v276 = vsub.s32 %v273, %v275
        %v277 = vrot.slane %v270, %v276
        %v279 = vsel %vm262, %v277, 0.0
        %s280 = sld [smem:[#allocation3]]
        %v281 = vstv %s280
        %v282 = vsel %vm262, %v281, 0.0
        %vm283 = vcmp.eq.s32.totalorder %v215, 1
        %v284 = vcombine.high %v270, %v270
        %v286 = vunpack.c.l.s4 1966171168
        %v287 = vunpack.c.0.s8 %v286
        %v288 = vlaneseq
        %v289 = vshrl.u32 %v288, 7
        %v290 = vsub.s32 %v287, %v289
        %v291 = vrot.slane %v284, %v290
        %v293 = vsel %vm283, %v291, %v279
        %s294 = sld [smem:[#allocation3 + $0x1]]
        %v295 = vstv %s294
        %v296 = vsel %vm283, %v295, %v282
        %vm297 = vcmp.eq.s32.totalorder %v215, 2
        %v298 = vcombine.high %v277, %v277
        %v300 = vsel %vm297, %v298, %v293
        %s301 = sld [smem:[#allocation3 + $0x2]]
        %v302 = vstv %s301
        %v303 = vsel %vm297, %v302, %v296
        %v306 = vcombine.low %v259, %v261
        %v308 = vunpack.c.l.s4 1966171168
        %v309 = vunpack.c.0.s8 %v308
        %v310 = vlaneseq
        %v311 = vshrl.u32 %v310, 7
        %v312 = vsub.s32 %v309, %v311
        %v313 = vrot.slane %v306, %v312
        %v315 = vunpack.c.l.s4 1966171168
        %v316 = vunpack.c.0.s8 %v315
        %v317 = vlaneseq
        %v318 = vshrl.u32 %v317, 7
        %v319 = vsub.s32 %v316, %v318
        %v320 = vrot.slane %v313, %v319
        %v322 = vsub.f32 %v300, %v320
        %v323 = vmul.f32 %v322, 1.442695
        %v324 = vpow.pop %v323
        %v325 = vsub.f32 1.0, %v324
        %v326 = vmul.f32 %v325, %v325
        %v327 = vsub.f32 0.0, %v303
        %v328 = vmul.f32 %v327, %v326
        %v329 = vmul.f32 %v328, %v322
        %v331 = vrot.slane %v329, 1
        %v333 = vadd.f32 %v329, %v331
        %v334 = vld [vmem:[%s189] sm:$0x1]
        %v335 = vadd.f32 %v334, %v333
        %336 = vst [vmem:[%s189] sm:$0x1] %v335
        %s337 = sand.u32 %s99, 1
        %s338 = scalar_lea.sflag [#allocation5], %s337
        %s339 = sand.u32 %s99, 1
        %s340 = scalar_lea.vmem [#allocation4], %s339
        // Predicated region
        $region33: #{tpu_custom_call.1} parent=27 // pred_check
          %p341 = pneg %p109
        $region34: #{tpu_custom_call.1} parent=27 // pred_check_branch
          %343 = sbr.rel (%p341) target = $region36
        $region35: #{tpu_custom_call.1} parent=27 // pred_region
          %s345 = ssub.s32 16, 16
          %346 = vsyncadd %s338, %s345
          %s347 = smul.addr %s27, 16
          %s348 = scalar_lea.hbm %s3, %s347
          %s350 = sshll.u32 %s340, 4
          %s351 = int_to_ptr.vmem [resolvable:$true] %s350
          %353 = dma.vmem_to_hbm [thread:$0]  %s351, 16, %s348, %s338
        $region36: #{tpu_custom_call.1} parent=27 // pred_fallthru
          _
      $region28: #{tpu_custom_call.1} parent=5 // pred_fallthru
        _
      %p354 = scmp.le.s32.totalorder 2, %s18
      // Predicated region
      $region37: #{tpu_custom_call.1} parent=5 // pred_check
        %p355 = pneg %p354
      $region38: #{tpu_custom_call.1} parent=5 // pred_check_branch
        %357 = sbr.rel (%p355) target = $region40
      $region39: #{tpu_custom_call.1} parent=5 // pred_region
        %s358 = ssub.s32 %s18, 2
        // Predicated region
        $region41: #{tpu_custom_call.1} parent=39 // pred_check
          %p359 = pneg %p115
        $region42: #{tpu_custom_call.1} parent=39 // pred_check_branch
          %361 = sbr.rel (%p359) target = $region44
        $region43: #{tpu_custom_call.1} parent=39 // pred_region
          %s362 = sand.u32 %s100, 1
          %s363 = scalar_lea.sflag [#allocation5], %s362
          %s364 = sand.u32 %s100, 1
          %s365 = scalar_lea.vmem [#allocation4], %s364
          %366 = dma.done %s363, 16
        $region44: #{tpu_custom_call.1} parent=39 // pred_fallthru
          _
      $region40: #{tpu_custom_call.1} parent=5 // pred_fallthru
        _
    $region6: #{tpu_custom_call.1} parent=1 // loop_footer
      %s22 = sadd.s32 1, %s18
    $region7: #{tpu_custom_call.1} parent=1 // loop_footer_branch
      %17 = sbr.rel target = $region3
    $region8: #{tpu_custom_call.1} parent=1 // loop_exit
      _
    %367 = vsyncpa [#allocation5], 1
    %s368 = scalar_lea.sflag [#allocation5], 1
    %369 = vsyncpa %s368, 1

</llo_original>
